<compile_context>
chip_gen: v6e
topology: v6e:2x2x1
jax: 0.10.0
libtpu: 0.0.40
codegen_flags: <defaults>
</compile_context>

<pallas_src>
import functools

import jax
import jax.numpy as jnp
from jax.experimental import pallas as pl
from jax.experimental.pallas import tpu as pltpu


def _round_up(x, m):
    return ((x + m - 1) // m) * m


def _inverse_dynamics_kernel(x1_ref, x2_ref, w1a_ref, w1b_ref, b1_ref,
                             w2_ref, b2_ref, out_ref):
    # Hidden layer: split matmul (no concat), f32 accumulation on the MXU.
    h = jnp.dot(x1_ref[...], w1a_ref[...], preferred_element_type=jnp.float32)
    h = h + jnp.dot(x2_ref[...], w1b_ref[...], preferred_element_type=jnp.float32)
    h = jnp.maximum(h + b1_ref[...], 0.0)
    # Output layer: lane-dense (padded-to-128) logits, f32 accumulation.
    logits = jnp.dot(h.astype(w2_ref.dtype), w2_ref[...],
                     preferred_element_type=jnp.float32) + b2_ref[...]
    out_ref[...] = logits.astype(out_ref.dtype)


def prepare_params(w1, b1, w2, b2, *, compute_dtype=jnp.bfloat16):
    """One-time host-side weight prep (hoisted out of the per-call path).

    w1: (576, 256), b1: (256,), w2: (256, A), b2: (A,)  -- already (in, out)
    relative to PyTorch's (out, in) Linear layout.

    Splits W1 across the 288-feature boundary (removes the in-kernel concat),
    zero-pads the output layer to a lane-dense width (multiple of 128) and
    casts weights to the compute dtype.  Biases stay f32 (added post-MXU).
    """
    D2, hidden = w1.shape
    D = D2 // 2
    A = w2.shape[1]
    a_pad = _round_up(A, 128)
    w1a = w1[:D].astype(compute_dtype)
    w1b = w1[D:].astype(compute_dtype)
    b1_2d = b1.reshape(1, hidden).astype(jnp.float32)
    w2_p = jnp.pad(w2, ((0, 0), (0, a_pad - A))).astype(compute_dtype)
    b2_2d = jnp.pad(b2.reshape(1, A), ((0, 0), (0, a_pad - A))).astype(jnp.float32)
    return (w1a, w1b, b1_2d, w2_p, b2_2d)


def _choose_grid(n_rows, tile_m, row_align, per_row_stream_bytes):
    """Pick (tile, padded_rows, grid) with minimal padding and balanced cores.

    - Tile is capped so the double-buffered streaming tiles stay under ~20 MiB
      (plus <1.5 MiB resident weights -> safely inside the 32 MiB vmem limit
      on v5e/v6e and well under v7x's 64 MiB per-TC budget).
    - grid_m is forced even (>= 2 when the rows allow it) so the "parallel"
      grid axis splits evenly across v7x's two TensorCores.
    - Tile is round_up(ceil(N / grid_m), row_align) so row padding is at most
      a few rows instead of up to a whole tile.
    """
    stream_budget = 20 * 1024 * 1024
    max_tm = max(row_align,
                 (stream_budget // per_row_stream_bytes) // row_align * row_align)
    tile_m_eff = max(row_align, min(tile_m, max_tm))
    grid_m = max(1, (n_rows + tile_m_eff - 1) // tile_m_eff)
    if grid_m == 1:
        if n_rows >= 2 * row_align:
            grid_m = 2
    elif grid_m % 2 == 1:
        grid_m += 1
    tm = _round_up((n_rows + grid_m - 1) // grid_m, row_align)
    n_pad = grid_m * tm
    return tm, n_pad, grid_m


def inverse_dynamics_forward(state_embedding, next_state_embedding, params,
                             *, num_actions, tile_m=2048):
    """state_embedding, next_state_embedding: (T, B, 288).
    params: output of prepare_params().  Returns (T, B, num_actions) f32 logits.
    """
    w1a, w1b, b1_2d, w2_p, b2_2d = params
    compute_dtype = w1a.dtype

    T, B, D = state_embedding.shape
    assert next_state_embedding.shape == (T, B, D)
    assert w1a.shape[0] == D and w1b.shape[0] == D
    hidden = w1a.shape[1]
    a_pad = w2_p.shape[1]
    A = num_actions
    assert A <= a_pad

    N = T * B
    act_bytes = jnp.dtype(compute_dtype).itemsize
    # Sublane granule: 16 rows for 16-bit compute (packed sublanes), 8 for f32.
    row_align = 8 if act_bytes >= 4 else 16
    # Streamed bytes per row (double-buffered): two activation tiles + f32 out.
    per_row_stream = 2 * (2 * D * act_bytes + a_pad * 4)
    tm, n_pad, grid_m = _choose_grid(N, tile_m, row_align, per_row_stream)

    # Flatten (T, B) -> N rows.  Cast only if the producer did not already
    # emit the compute dtype (ideal: producer emits bf16 so no extra copy).
    x1 = state_embedding.reshape(N, D)
    x2 = next_state_embedding.reshape(N, D)
    if x1.dtype != compute_dtype:
        x1 = x1.astype(compute_dtype)
        x2 = x2.astype(compute_dtype)
    if n_pad != N:
        row_pad = ((0, n_pad - N), (0, 0))
        x1 = jnp.pad(x1, row_pad)
        x2 = jnp.pad(x2, row_pad)

    cost = pl.CostEstimate(
        flops=2 * n_pad * (2 * D) * hidden + 2 * n_pad * hidden * a_pad,
        transcendentals=0,
        bytes_accessed=(2 * n_pad * D * act_bytes            # streamed activations
                        + n_pad * a_pad * 4                  # f32 logits out
                        + (2 * D * hidden + hidden * a_pad) * act_bytes  # weights
                        + (hidden + a_pad) * 4),             # biases
    )

    grid_spec = pltpu.PrefetchScalarGridSpec(
        num_scalar_prefetch=0,
        grid=(grid_m,),
        in_specs=[
            pl.BlockSpec((tm, D), lambda i: (i, 0)),          # x1 tile (streamed)
            pl.BlockSpec((tm, D), lambda i: (i, 0)),          # x2 tile (streamed)
            pl.BlockSpec((D, hidden), lambda i: (0, 0)),      # W1 top half (resident)
            pl.BlockSpec((D, hidden), lambda i: (0, 0)),      # W1 bottom half (resident)
            pl.BlockSpec((1, hidden), lambda i: (0, 0)),      # b1 (resident)
            pl.BlockSpec((hidden, a_pad), lambda i: (0, 0)),  # W2 padded (resident)
            pl.BlockSpec((1, a_pad), lambda i: (0, 0)),       # b2 padded (resident)
        ],
        out_specs=pl.BlockSpec((tm, a_pad), lambda i: (i, 0)),
    )

    out = pl.pallas_call(
        _inverse_dynamics_kernel,
        out_shape=jax.ShapeDtypeStruct((n_pad, a_pad), jnp.float32),
        grid_spec=grid_spec,
        compiler_params=pltpu.CompilerParams(
            dimension_semantics=("parallel",),   # megacore shard on v7x
            vmem_limit_bytes=32 * 1024 * 1024,   # explicit: v5e scoped default is 16 MiB
        ),
        cost_estimate=cost,
    )(x1, x2, w1a, w1b, b1_2d, w2_p, b2_2d)

    # Padded rows / lanes are garbage-free but nonzero; always slice here.
    return out[:N, :A].reshape(T, B, A)


def make_params(key, num_actions, in_features=2 * 288, hidden=256):
    """Deterministic init matching the PyTorch module: orthogonal weights
    (gain=sqrt(2) for the ReLU layer, gain=1 for the output layer), zero
    biases. Stored as (in, out) so the kernel computes x @ W."""
    k1, k2 = jax.random.split(key)
    orth_relu = jax.nn.initializers.orthogonal(scale=jnp.sqrt(2.0))
    orth = jax.nn.initializers.orthogonal(scale=1.0)
    w1 = orth_relu(k1, (hidden, in_features), jnp.float32).T
    b1 = jnp.zeros((hidden,), jnp.float32)
    w2 = orth(k2, (num_actions, hidden), jnp.float32).T
    b2 = jnp.zeros((num_actions,), jnp.float32)
    return w1, b1, w2, b2


def reference_forward(state_embedding, next_state_embedding, w1, b1, w2, b2):
    x = jnp.concatenate([state_embedding, next_state_embedding], axis=2)
    h = jnp.maximum(x @ w1 + b1, 0.0)
    return h @ w2 + b2


if __name__ == "__main__":
    key = jax.random.PRNGKey(0)
    k_params, k_s, k_ns = jax.random.split(key, 3)

    T, B, D = 8, 2, 288
    num_actions = 7

    w1, b1, w2, b2 = make_params(k_params, num_actions)
    state_embedding = jax.random.normal(k_s, (T, B, D), jnp.float32)
    next_state_embedding = jax.random.normal(k_ns, (T, B, D), jnp.float32)

    ref = reference_forward(state_embedding, next_state_embedding,
                            w1, b1, w2, b2)

    fwd = jax.jit(functools.partial(inverse_dynamics_forward,
                                    num_actions=num_actions))

    # Full-precision path: tight tolerance vs reference.
    params_f32 = prepare_params(w1, b1, w2, b2, compute_dtype=jnp.float32)
    logits_f32 = fwd(state_embedding, next_state_embedding, params_f32)
    logits_f32 = jax.block_until_ready(logits_f32)
    assert logits_f32.shape == (T, B, num_actions)
    assert jnp.allclose(logits_f32, ref, atol=1e-4, rtol=1e-4)

    # Default bf16 compute path (halves streamed HBM bytes on v6e/v7x, native
    # MXU dtype on v5e): looser check since inputs are quantized to bf16.
    params_bf16 = prepare_params(w1, b1, w2, b2)   # compute_dtype=bf16 default
    logits_bf16 = fwd(state_embedding, next_state_embedding, params_bf16)
    logits_bf16 = jax.block_until_ready(logits_bf16)
    assert logits_bf16.shape == (T, B, num_actions)
    assert jnp.allclose(logits_bf16, ref, atol=2e-1, rtol=5e-2)

    print("KERNEL_OK")
</pallas_src>

<mosaic_0001>
module attributes {stable_mosaic.version = 11 : i64} {
  func.func @_inverse_dynamics_kernel(%arg0: i32, %arg1: memref<8x288xf32, #tpu.memory_space<vmem>>, %arg2: memref<8x288xf32, #tpu.memory_space<vmem>>, %arg3: memref<288x256xf32, #tpu.memory_space<vmem>>, %arg4: memref<288x256xf32, #tpu.memory_space<vmem>>, %arg5: memref<1x256xf32, #tpu.memory_space<vmem>>, %arg6: memref<256x128xf32, #tpu.memory_space<vmem>>, %arg7: memref<1x128xf32, #tpu.memory_space<vmem>>, %arg8: memref<8x128xf32, #tpu.memory_space<vmem>>) attributes {dimension_semantics = [#tpu.dimension_semantics<parallel>], iteration_bounds = array<i64: 2>, scalar_prefetch = 0 : i64, scratch_operands = 0 : i64, tpu.core_type = #tpu.core_type<tc>, window_params = [{transform_indices = @transform_0, window_bounds = array<i64: 8, 288>}, {transform_indices = @transform_1, window_bounds = array<i64: 8, 288>}, {pipeline_mode = #tpu.pipeline_mode<synchronous>, transform_indices = @transform_2, window_bounds = array<i64: 288, 256>}, {pipeline_mode = #tpu.pipeline_mode<synchronous>, transform_indices = @transform_3, window_bounds = array<i64: 288, 256>}, {pipeline_mode = #tpu.pipeline_mode<synchronous>, transform_indices = @transform_4, window_bounds = array<i64: 1, 256>}, {pipeline_mode = #tpu.pipeline_mode<synchronous>, transform_indices = @transform_5, window_bounds = array<i64: 256, 128>}, {pipeline_mode = #tpu.pipeline_mode<synchronous>, transform_indices = @transform_6, window_bounds = array<i64: 1, 128>}, {transform_indices = @transform_7, window_bounds = array<i64: 8, 128>}]} {
    %c0 = arith.constant 0 : index
    %c0_0 = arith.constant 0 : index
    %0 = vector.load %arg1[%c0, %c0_0] : memref<8x288xf32, #tpu.memory_space<vmem>>, vector<8x288xf32>
    %c0_1 = arith.constant 0 : index
    %c0_2 = arith.constant 0 : index
    %1 = vector.load %arg3[%c0_1, %c0_2] : memref<288x256xf32, #tpu.memory_space<vmem>>, vector<288x256xf32>
    %cst = arith.constant dense<0.000000e+00> : vector<8x256xf32>
    %2 = tpu.matmul %0, %1, %cst {dimension_numbers = #tpu.dot_dimension_numbers<[1], [0], [0], [1], [0, 0, 1, 1], [], []>} : vector<8x288xf32>, vector<288x256xf32>, vector<8x256xf32> -> vector<8x256xf32>
    %c0_3 = arith.constant 0 : index
    %c0_4 = arith.constant 0 : index
    %3 = vector.load %arg2[%c0_3, %c0_4] : memref<8x288xf32, #tpu.memory_space<vmem>>, vector<8x288xf32>
    %c0_5 = arith.constant 0 : index
    %c0_6 = arith.constant 0 : index
    %4 = vector.load %arg4[%c0_5, %c0_6] : memref<288x256xf32, #tpu.memory_space<vmem>>, vector<288x256xf32>
    %cst_7 = arith.constant dense<0.000000e+00> : vector<8x256xf32>
    %5 = tpu.matmul %3, %4, %cst_7 {dimension_numbers = #tpu.dot_dimension_numbers<[1], [0], [0], [1], [0, 0, 1, 1], [], []>} : vector<8x288xf32>, vector<288x256xf32>, vector<8x256xf32> -> vector<8x256xf32>
    %6 = arith.addf %2, %5 : vector<8x256xf32>
    %c0_8 = arith.constant 0 : index
    %c0_9 = arith.constant 0 : index
    %7 = vector.load %arg5[%c0_8, %c0_9] : memref<1x256xf32, #tpu.memory_space<vmem>>, vector<1x256xf32>
    %8 = vector.broadcast %7 : vector<1x256xf32> to vector<8x256xf32>
    %9 = arith.addf %6, %8 : vector<8x256xf32>
    %cst_10 = arith.constant 0.000000e+00 : f32
    %10 = vector.broadcast %cst_10 : f32 to vector<8x256xf32>
    %11 = arith.maximumf %9, %10 : vector<8x256xf32>
    %c0_11 = arith.constant 0 : index
    %c0_12 = arith.constant 0 : index
    %12 = vector.load %arg6[%c0_11, %c0_12] : memref<256x128xf32, #tpu.memory_space<vmem>>, vector<256x128xf32>
    %cst_13 = arith.constant dense<0.000000e+00> : vector<8x128xf32>
    %13 = tpu.matmul %11, %12, %cst_13 {dimension_numbers = #tpu.dot_dimension_numbers<[1], [0], [0], [1], [0, 0, 1, 1], [], []>} : vector<8x256xf32>, vector<256x128xf32>, vector<8x128xf32> -> vector<8x128xf32>
    %c0_14 = arith.constant 0 : index
    %c0_15 = arith.constant 0 : index
    %14 = vector.load %arg7[%c0_14, %c0_15] : memref<1x128xf32, #tpu.memory_space<vmem>>, vector<1x128xf32>
    %15 = vector.broadcast %14 : vector<1x128xf32> to vector<8x128xf32>
    %16 = arith.addf %13, %15 : vector<8x128xf32>
    %c0_16 = arith.constant 0 : index
    %c0_17 = arith.constant 0 : index
    %17 = vector.load %arg8[%c0_16, %c0_17] : memref<8x128xf32, #tpu.memory_space<vmem>>, vector<8x128xf32>
    tpu.vector_store %arg8[%c0_16, %c0_17], %16 {strides = array<i32>} : memref<8x128xf32, #tpu.memory_space<vmem>>, vector<8x128xf32>,
    return
  }
  func.func @transform_0(%arg0: i32) -> (i32, i32) {
    %c0_i32 = arith.constant 0 : i32
    %c0_i32_0 = arith.constant 0 : i32
    return %arg0, %c0_i32 : i32, i32
  }
  func.func @transform_1(%arg0: i32) -> (i32, i32) {
    %c0_i32 = arith.constant 0 : i32
    %c0_i32_0 = arith.constant 0 : i32
    return %arg0, %c0_i32 : i32, i32
  }
  func.func @transform_2(%arg0: i32) -> (i32, i32) {
    %c0_i32 = arith.constant 0 : i32
    %c0_i32_0 = arith.constant 0 : i32
    %c0_i32_1 = arith.constant 0 : i32
    return %c0_i32, %c0_i32_0 : i32, i32
  }
  func.func @transform_3(%arg0: i32) -> (i32, i32) {
    %c0_i32 = arith.constant 0 : i32
    %c0_i32_0 = arith.constant 0 : i32
    %c0_i32_1 = arith.constant 0 : i32
    return %c0_i32, %c0_i32_0 : i32, i32
  }
  func.func @transform_4(%arg0: i32) -> (i32, i32) {
    %c0_i32 = arith.constant 0 : i32
    %c0_i32_0 = arith.constant 0 : i32
    %c0_i32_1 = arith.constant 0 : i32
    return %c0_i32, %c0_i32_0 : i32, i32
  }
  func.func @transform_5(%arg0: i32) -> (i32, i32) {
    %c0_i32 = arith.constant 0 : i32
    %c0_i32_0 = arith.constant 0 : i32
    %c0_i32_1 = arith.constant 0 : i32
    return %c0_i32, %c0_i32_0 : i32, i32
  }
  func.func @transform_6(%arg0: i32) -> (i32, i32) {
    %c0_i32 = arith.constant 0 : i32
    %c0_i32_0 = arith.constant 0 : i32
    %c0_i32_1 = arith.constant 0 : i32
    return %c0_i32, %c0_i32_0 : i32, i32
  }
  func.func @transform_7(%arg0: i32) -> (i32, i32) {
    %c0_i32 = arith.constant 0 : i32
    %c0_i32_0 = arith.constant 0 : i32
    return %arg0, %c0_i32 : i32, i32
  }
}

</mosaic_0001>

<llo_original>
// kernel: inverse_dynamics_forward.1
$region0: #{inverse_dynamics_forward.1}
  #allocation0 [shape = 'u32[]', space=smem, size = 0x4, offset = 0x4, fixed_abs, tag = 'smem constant byte address 0x4 - core index']
  #allocation1 [shape = 'u32[144,128]{1,0:T(1,128)}', space=vmem, size = 0x12000, scoped, tag = 'internal scratch']
  %s0 = inlined_call_operand.vmem [shape: f32[16,288], index: 0, kind: input, shape index: {}]
  %s1 = inlined_call_operand.vmem [shape: f32[16,288], index: 1, kind: input, shape index: {}]
  %s2 = inlined_call_operand.hbm [shape: f32[288,256], index: 2, kind: input, shape index: {}]
  %s3 = inlined_call_operand.hbm [shape: f32[288,256], index: 3, kind: input, shape index: {}]
  %s4 = inlined_call_operand.vmem [shape: f32[1,256], index: 4, kind: input, shape index: {}]
  %s5 = inlined_call_operand.hbm [shape: f32[256,128], index: 5, kind: input, shape index: {}]
  %s6 = inlined_call_operand.vmem [shape: f32[1,128], index: 6, kind: input, shape index: {}]
  %s7 = inlined_call_operand.vmem [shape: f32[16,128], index: 7, kind: output, shape index: {}]
  %s8 = sld [smem:[#allocation0]]
  $region73: #{inverse_dynamics_forward.1} parent=0
    _
  %s10 = ssub.s32 1, %s8
  %s11 = scalar_select 0, %s10, %s8
  $region1: #{inverse_dynamics_forward.1} parent=0
    #allocation2 [shape = 'u8[294912]{0}', space=vmem, size = 0x48000, scoped, tag = 'input window, operand 2, single buffered']
    #allocation3 [shape = 's32[2]{0}', space=sflag, size = 0x8, scoped, tag = 'scoped memory for inverse_dynamics_forward.1']
    #allocation4 [shape = 'u8[294912]{0}', space=vmem, size = 0x48000, scoped, tag = 'input window, operand 3, single buffered']
    #allocation5 [shape = 's32[1]{0}', space=sflag, size = 0x4, scoped, tag = 'scoped memory for inverse_dynamics_forward.1']
    #allocation6 [shape = 'u8[131072]{0}', space=vmem, size = 0x20000, scoped, tag = 'input window, operand 5, single buffered']
    %12 = vsyncpa [#allocation3], 0
    %13 = vsyncpa [#allocation5], 0
    loop: start=0, step=1, limit=4
    $region2: #{inverse_dynamics_forward.1} parent=1 // loop_pre_header
      _
    $region3: #{inverse_dynamics_forward.1} parent=1 // loop_header
      %s15 = sphi 0, %s19
      %p16 = scmp.ge.s32.totalorder %s15, 4
      %s25 = sphi 0, %s27
      %s28 = sphi 0, %s25
      %s29 = sphi 0, %s28
      %s45 = sphi 0, %s29
      %s51 = sphi 0, %s53
      %s54 = sphi 0, %s51
      %s55 = sphi 0, %s54
      %s71 = sphi 0, %s55
      %s75 = sphi 0, %s75
      %s77 = sphi 0, %s75
      %s78 = sphi 0, %s77
      %s92 = sphi 0, %s78
      %s96 = sphi 0, %s96
      %s98 = sphi 0, %s96
      %s99 = sphi 0, %s98
      %s113 = sphi 0, %s99
      %s117 = sphi 0, %s117
      %s119 = sphi 0, %s117
      %s120 = sphi 0, %s119
      %s134 = sphi 0, %s120
      %s138 = sphi 0, %s138
      %s140 = sphi 0, %s138
      %s141 = sphi 0, %s140
      %s155 = sphi 0, %s141
      %s159 = sphi 0, %s159
      %s161 = sphi 0, %s159
      %s162 = sphi 0, %s161
      %s176 = sphi 0, %s162
      %s182 = sphi 0, %s184
      %s185 = sphi 0, %s182
      %s186 = sphi 0, %s185
      %s202 = sphi 0, %s186
    $region4: #{inverse_dynamics_forward.1} parent=1 // loop_header_branch
      %18 = sbr.rel (%p16) target = $region8
    $region5: #{inverse_dynamics_forward.1} parent=1 // loop_body
      %s20 = ssub.s32 %s15, 1
      %s21 = ssub.s32 %s15, 2
      %s22 = sadd.s32 %s15, 1
      %s23 = ssub.s32 %s15, %s22
      %p24 = scmp.eq.s32.totalorder %s23, 0
      %s26 = sadd.s32 %s25, 1
      %s27 = scalar_select %p24, %s25, %s26
      %p30 = pneg %p24
      %p31 = scmp.eq.s32.totalorder %s15, 1
      %p32 = por %p30, %p31
      %p33 = scmp.ne.s32.totalorder %s25, %s28
      %p34 = scmp.eq.s32.totalorder %s15, 0
      %p35 = por %p33, %p34
      %p36 = scmp.ne.s32.totalorder %s25, %s28
      %p37 = scmp.eq.s32.totalorder %s20, 1
      %p38 = por %p36, %p37
      %p39 = scmp.ne.s32.totalorder %s28, %s29
      %p40 = scmp.eq.s32.totalorder %s20, 0
      %p41 = por %p39, %p40
      %p42 = scmp.ne.s32.totalorder %s28, %s29
      %p43 = scmp.eq.s32.totalorder %s21, 1
      %p44 = por %p42, %p43
      %p46 = scmp.ne.s32.totalorder %s29, %s45
      %p47 = scmp.eq.s32.totalorder %s21, 0
      %p48 = por %p46, %p47
      %s49 = ssub.s32 %s15, %s22
      %p50 = scmp.eq.s32.totalorder %s49, 0
      %s52 = sadd.s32 %s51, 1
      %s53 = scalar_select %p50, %s51, %s52
      %p56 = pneg %p50
      %p57 = scmp.eq.s32.totalorder %s15, 1
      %p58 = por %p56, %p57
      %p59 = scmp.ne.s32.totalorder %s51, %s54
      %p60 = scmp.eq.s32.totalorder %s15, 0
      %p61 = por %p59, %p60
      %p62 = scmp.ne.s32.totalorder %s51, %s54
      %p63 = scmp.eq.s32.totalorder %s20, 1
      %p64 = por %p62, %p63
      %p65 = scmp.ne.s32.totalorder %s54, %s55
      %p66 = scmp.eq.s32.totalorder %s20, 0
      %p67 = por %p65, %p66
      %p68 = scmp.ne.s32.totalorder %s54, %s55
      %p69 = scmp.eq.s32.totalorder %s21, 1
      %p70 = por %p68, %p69
      %p72 = scmp.ne.s32.totalorder %s55, %s71
      %p73 = scmp.eq.s32.totalorder %s21, 0
      %p74 = por %p72, %p73
      %s76 = sadd.s32 %s75, 1
      %p79 = scmp.eq.s32.totalorder %s15, 1
      %p80 = scmp.ne.s32.totalorder %s75, %s77
      %p81 = scmp.eq.s32.totalorder %s15, 0
      %p82 = por %p80, %p81
      %p83 = scmp.ne.s32.totalorder %s75, %s77
      %p84 = scmp.eq.s32.totalorder %s20, 1
      %p85 = por %p83, %p84
      %p86 = scmp.ne.s32.totalorder %s77, %s78
      %p87 = scmp.eq.s32.totalorder %s20, 0
      %p88 = por %p86, %p87
      %p89 = scmp.ne.s32.totalorder %s77, %s78
      %p90 = scmp.eq.s32.totalorder %s21, 1
      %p91 = por %p89, %p90
      %p93 = scmp.ne.s32.totalorder %s78, %s92
      %p94 = scmp.eq.s32.totalorder %s21, 0
      %p95 = por %p93, %p94
      %s97 = sadd.s32 %s96, 1
      %p100 = scmp.eq.s32.totalorder %s15, 1
      %p101 = scmp.ne.s32.totalorder %s96, %s98
      %p102 = scmp.eq.s32.totalorder %s15, 0
      %p103 = por %p101, %p102
      %p104 = scmp.ne.s32.totalorder %s96, %s98
      %p105 = scmp.eq.s32.totalorder %s20, 1
      %p106 = por %p104, %p105
      %p107 = scmp.ne.s32.totalorder %s98, %s99
      %p108 = scmp.eq.s32.totalorder %s20, 0
      %p109 = por %p107, %p108
      %p110 = scmp.ne.s32.totalorder %s98, %s99
      %p111 = scmp.eq.s32.totalorder %s21, 1
      %p112 = por %p110, %p111
      %p114 = scmp.ne.s32.totalorder %s99, %s113
      %p115 = scmp.eq.s32.totalorder %s21, 0
      %p116 = por %p114, %p115
      %s118 = sadd.s32 %s117, 1
      %p121 = scmp.eq.s32.totalorder %s15, 1
      %p122 = scmp.ne.s32.totalorder %s117, %s119
      %p123 = scmp.eq.s32.totalorder %s15, 0
      %p124 = por %p122, %p123
      %p125 = scmp.ne.s32.totalorder %s117, %s119
      %p126 = scmp.eq.s32.totalorder %s20, 1
      %p127 = por %p125, %p126
      %p128 = scmp.ne.s32.totalorder %s119, %s120
      %p129 = scmp.eq.s32.totalorder %s20, 0
      %p130 = por %p128, %p129
      %p131 = scmp.ne.s32.totalorder %s119, %s120
      %p132 = scmp.eq.s32.totalorder %s21, 1
      %p133 = por %p131, %p132
      %p135 = scmp.ne.s32.totalorder %s120, %s134
      %p136 = scmp.eq.s32.totalorder %s21, 0
      %p137 = por %p135, %p136
      %s139 = sadd.s32 %s138, 1
      %p142 = scmp.eq.s32.totalorder %s15, 1
      %p143 = scmp.ne.s32.totalorder %s138, %s140
      %p144 = scmp.eq.s32.totalorder %s15, 0
      %p145 = por %p143, %p144
      %p146 = scmp.ne.s32.totalorder %s138, %s140
      %p147 = scmp.eq.s32.totalorder %s20, 1
      %p148 = por %p146, %p147
      %p149 = scmp.ne.s32.totalorder %s140, %s141
      %p150 = scmp.eq.s32.totalorder %s20, 0
      %p151 = por %p149, %p150
      %p152 = scmp.ne.s32.totalorder %s140, %s141
      %p153 = scmp.eq.s32.totalorder %s21, 1
      %p154 = por %p152, %p153
      %p156 = scmp.ne.s32.totalorder %s141, %s155
      %p157 = scmp.eq.s32.totalorder %s21, 0
      %p158 = por %p156, %p157
      %s160 = sadd.s32 %s159, 1
      %p163 = scmp.eq.s32.totalorder %s15, 1
      %p164 = scmp.ne.s32.totalorder %s159, %s161
      %p165 = scmp.eq.s32.totalorder %s15, 0
      %p166 = por %p164, %p165
      %p167 = scmp.ne.s32.totalorder %s159, %s161
      %p168 = scmp.eq.s32.totalorder %s20, 1
      %p169 = por %p167, %p168
      %p170 = scmp.ne.s32.totalorder %s161, %s162
      %p171 = scmp.eq.s32.totalorder %s20, 0
      %p172 = por %p170, %p171
      %p173 = scmp.ne.s32.totalorder %s161, %s162
      %p174 = scmp.eq.s32.totalorder %s21, 1
      %p175 = por %p173, %p174
      %p177 = scmp.ne.s32.totalorder %s162, %s176
      %p178 = scmp.eq.s32.totalorder %s21, 0
      %p179 = por %p177, %p178
      %s180 = ssub.s32 %s15, %s22
      %p181 = scmp.eq.s32.totalorder %s180, 0
      %s183 = sadd.s32 %s182, 1
      %s184 = scalar_select %p181, %s182, %s183
      %p187 = pneg %p181
      %p188 = scmp.eq.s32.totalorder %s15, 1
      %p189 = por %p187, %p188
      %p190 = scmp.ne.s32.totalorder %s182, %s185
      %p191 = scmp.eq.s32.totalorder %s15, 0
      %p192 = por %p190, %p191
      %p193 = scmp.ne.s32.totalorder %s182, %s185
      %p194 = scmp.eq.s32.totalorder %s20, 1
      %p195 = por %p193, %p194
      %p196 = scmp.ne.s32.totalorder %s185, %s186
      %p197 = scmp.eq.s32.totalorder %s20, 0
      %p198 = por %p196, %p197
      %p199 = scmp.ne.s32.totalorder %s185, %s186
      %p200 = scmp.eq.s32.totalorder %s21, 1
      %p201 = por %p199, %p200
      %p203 = scmp.ne.s32.totalorder %s186, %s202
      %p204 = scmp.eq.s32.totalorder %s21, 0
      %p205 = por %p203, %p204
      %p206 = scmp.le.s32.totalorder 1, %s15
      %p207 = scmp.lt.s32.totalorder %s15, 3
      %p208 = pnand %p206, %p207
      %p209 = pneg %p208
      // Predicated region
      $region9: #{inverse_dynamics_forward.1} parent=5 // pred_check
        _
      $region10: #{inverse_dynamics_forward.1} parent=5 // pred_check_branch
        %211 = sbr.rel (%p208) target = $region12
      $region11: #{inverse_dynamics_forward.1} parent=5 // pred_region
        %s212 = ssub.s32 %s15, 1
        // Predicated region
        $region13: #{inverse_dynamics_forward.1} parent=11 // pred_check
          %p213 = pneg %p88
        $region14: #{inverse_dynamics_forward.1} parent=11 // pred_check_branch
          %215 = sbr.rel (%p213) target = $region16
        $region15: #{inverse_dynamics_forward.1} parent=11 // pred_region
          %s217 = ssub.s32 9216, 9216
          %218 = vsyncadd [#allocation3], %s217
          %s219 = sshll.u32 [#allocation2], 4
          %s220 = int_to_ptr.vmem [resolvable:$true] %s219
          %225 = dma.hbm_to_vmem [thread:$0]  %s2, 9216, %s220, [#allocation3], 256, 256, 16
        $region16: #{inverse_dynamics_forward.1} parent=11 // pred_fallthru
          _
        // Predicated region
        $region17: #{inverse_dynamics_forward.1} parent=11 // pred_check
          %p226 = pneg %p109
        $region18: #{inverse_dynamics_forward.1} parent=11 // pred_check_branch
          %228 = sbr.rel (%p226) target = $region20
        $region19: #{inverse_dynamics_forward.1} parent=11 // pred_region
          %s230 = ssub.s32 9216, 9216
          %231 = vsyncadd [#allocation5], %s230
          %s232 = sshll.u32 [#allocation4], 4
          %s233 = int_to_ptr.vmem [resolvable:$true] %s232
          %238 = dma.hbm_to_vmem [thread:$0]  %s3, 9216, %s233, [#allocation5], 256, 256, 16
        $region20: #{inverse_dynamics_forward.1} parent=11 // pred_fallthru
          _
        // Predicated region
        $region21: #{inverse_dynamics_forward.1} parent=11 // pred_check
          %p239 = pneg %p130
        $region22: #{inverse_dynamics_forward.1} parent=11 // pred_check_branch
          %241 = sbr.rel (%p239) target = $region24
        $region23: #{inverse_dynamics_forward.1} parent=11 // pred_region
          _
        $region24: #{inverse_dynamics_forward.1} parent=11 // pred_fallthru
          _
        // Predicated region
        $region25: #{inverse_dynamics_forward.1} parent=11 // pred_check
          %p242 = pneg %p151
        $region26: #{inverse_dynamics_forward.1} parent=11 // pred_check_branch
          %244 = sbr.rel (%p242) target = $region28
        $region27: #{inverse_dynamics_forward.1} parent=11 // pred_region
          %s246 = ssub.s32 4096, 4096
          %247 = vsyncadd [#allocation5], %s246
          %s248 = sshll.u32 [#allocation6], 4
          %s249 = int_to_ptr.vmem [resolvable:$true] %s248
          %254 = dma.hbm_to_vmem [thread:$0]  %s5, 4096, %s249, [#allocation5], 128, 128, 8
        $region28: #{inverse_dynamics_forward.1} parent=11 // pred_fallthru
          _
        // Predicated region
        $region29: #{inverse_dynamics_forward.1} parent=11 // pred_check
          %p255 = pneg %p172
        $region30: #{inverse_dynamics_forward.1} parent=11 // pred_check_branch
          %257 = sbr.rel (%p255) target = $region32
        $region31: #{inverse_dynamics_forward.1} parent=11 // pred_region
          _
        $region32: #{inverse_dynamics_forward.1} parent=11 // pred_fallthru
          _
      $region12: #{inverse_dynamics_forward.1} parent=5 // pred_fallthru
        _
      %p258 = scmp.lt.s32.totalorder %s15, 2
      // Predicated region
      $region33: #{inverse_dynamics_forward.1} parent=5 // pred_check
        %p259 = pneg %p258
      $region34: #{inverse_dynamics_forward.1} parent=5 // pred_check_branch
        %261 = sbr.rel (%p259) target = $region36
      $region35: #{inverse_dynamics_forward.1} parent=5 // pred_region
        // Predicated region
        $region37: #{inverse_dynamics_forward.1} parent=35 // pred_check
          %p262 = pneg %p35
        $region38: #{inverse_dynamics_forward.1} parent=35 // pred_check_branch
          %264 = sbr.rel (%p262) target = $region40
        $region39: #{inverse_dynamics_forward.1} parent=35 // pred_region
          %p265 = scmp.lt.s32.totalorder %s15, 1
          %s266 = scalar_select %p265, %s15, 1
          %s267 = smul.addr %s266, 3
          %s268 = smul.addr %s267, 8
          %s269 = scalar_lea.vmem %s0, %s268
        $region40: #{inverse_dynamics_forward.1} parent=35 // pred_fallthru
          _
        // Predicated region
        $region41: #{inverse_dynamics_forward.1} parent=35 // pred_check
          %p270 = pneg %p61
        $region42: #{inverse_dynamics_forward.1} parent=35 // pred_check_branch
          %272 = sbr.rel (%p270) target = $region44
        $region43: #{inverse_dynamics_forward.1} parent=35 // pred_region
          %p273 = scmp.lt.s32.totalorder %s15, 1
          %s274 = scalar_select %p273, %s15, 1
          %s275 = smul.addr %s274, 3
          %s276 = smul.addr %s275, 8
          %s277 = scalar_lea.vmem %s1, %s276
        $region44: #{inverse_dynamics_forward.1} parent=35 // pred_fallthru
          _
      $region36: #{inverse_dynamics_forward.1} parent=5 // pred_fallthru
        _
      %p278 = scmp.le.s32.totalorder 1, %s15
      %p279 = scmp.lt.s32.totalorder %s15, 3
      %p280 = pnand %p278, %p279
      %p281 = pneg %p280
      // Predicated region
      $region45: #{inverse_dynamics_forward.1} parent=5 // pred_check
        _
      $region46: #{inverse_dynamics_forward.1} parent=5 // pred_check_branch
        %283 = sbr.rel (%p280) target = $region48
      $region47: #{inverse_dynamics_forward.1} parent=5 // pred_region
        %s284 = ssub.s32 %s15, 1
        // Predicated region
        $region49: #{inverse_dynamics_forward.1} parent=47 // pred_check
          %p285 = pneg %p88
        $region50: #{inverse_dynamics_forward.1} parent=47 // pred_check_branch
          %287 = sbr.rel (%p285) target = $region52
        $region51: #{inverse_dynamics_forward.1} parent=47 // pred_region
          %288 = dma.done [#allocation3], 9216
        $region52: #{inverse_dynamics_forward.1} parent=47 // pred_fallthru
          _
        // Predicated region
        $region53: #{inverse_dynamics_forward.1} parent=47 // pred_check
          %p289 = pneg %p109
        $region54: #{inverse_dynamics_forward.1} parent=47 // pred_check_branch
          %291 = sbr.rel (%p289) target = $region56
        $region55: #{inverse_dynamics_forward.1} parent=47 // pred_region
          %292 = dma.done [#allocation5], 9216
        $region56: #{inverse_dynamics_forward.1} parent=47 // pred_fallthru
          _
        // Predicated region
        $region57: #{inverse_dynamics_forward.1} parent=47 // pred_check
          %p293 = pneg %p151
        $region58: #{inverse_dynamics_forward.1} parent=47 // pred_check_branch
          %295 = sbr.rel (%p293) target = $region60
        $region59: #{inverse_dynamics_forward.1} parent=47 // pred_region
          %296 = dma.done [#allocation5], 4096
        $region60: #{inverse_dynamics_forward.1} parent=47 // pred_fallthru
          _
        %p297 = scmp.lt.s32.totalorder %s20, 1
        %s298 = scalar_select %p297, %s20, 1
        %s299 = smul.addr %s298, 3
        %s300 = smul.addr %s299, 8
        %s301 = scalar_lea.vmem %s0, %s300
        %p302 = pneg %p41
        %p303 = pneg %p38
        %p304 = scmp.lt.s32.totalorder %s20, 1
        %s305 = scalar_select %p304, %s20, 1
        %s306 = smul.addr %s305, 3
        %s307 = smul.addr %s306, 8
        %s308 = scalar_lea.vmem %s1, %s307
        %p309 = pneg %p67
        %p310 = pneg %p64
        %p311 = pneg %p88
        %p312 = pneg %p85
        %p313 = pneg %p109
        %p314 = pneg %p106
        %p315 = pneg %p130
        %p316 = pneg %p127
        %p317 = pneg %p151
        %p318 = pneg %p148
        %p319 = pneg %p172
        %p320 = pneg %p169
        %p321 = pneg %p198
        %p322 = pneg %p195
        %p323 = scmp.lt.s32.totalorder %s20, 1
        %s324 = scalar_select %p323, %s20, 1
        %s325 = smul.addr %s324, 8
        %s326 = scalar_lea.vmem %s7, %s325
        %p327 = scmp.lt.s32.totalorder %s20, 1
        %s328 = scalar_select %p327, %s20, 1
        %s329 = smul.addr %s328, 3
        %s330 = smul.addr %s329, 8
        %s331 = scalar_lea.vmem %s0, %s330
        %p332 = scmp.lt.s32.totalorder %s20, 1
        %s333 = scalar_select %p332, %s20, 1
        %s334 = smul.addr %s333, 3
        %s335 = smul.addr %s334, 8
        %s336 = scalar_lea.vmem %s1, %s335
        %p337 = scmp.lt.s32.totalorder %s20, 1
        %s338 = scalar_select %p337, %s20, 1
        %s339 = smul.addr %s338, 8
        %s340 = scalar_lea.vmem %s7, %s339
        %v341 = vld [vmem:[%s331] sm:$0xff]
        %v342 = vld [vmem:[%s331 + $0x8] sm:$0xff]
        %v343 = vld [vmem:[%s331 + $0x10] sm:$0xff]
        %v344 = vld [vmem:[#allocation2] sm:$0xff]
        %v345 = vld [vmem:[#allocation2 + $0x8] sm:$0xff]
        %v346 = vld [vmem:[#allocation2 + $0x10] sm:$0xff]
        %v347 = vld [vmem:[#allocation2 + $0x18] sm:$0xff]
        %v348 = vld [vmem:[#allocation2 + $0x20] sm:$0xff]
        %v349 = vld [vmem:[#allocation2 + $0x28] sm:$0xff]
        %v350 = vld [vmem:[#allocation2 + $0x30] sm:$0xff]
        %v351 = vld [vmem:[#allocation2 + $0x38] sm:$0xff]
        %v352 = vld [vmem:[#allocation2 + $0x40] sm:$0xff]
        %v353 = vld [vmem:[#allocation2 + $0x48] sm:$0xff]
        %v354 = vld [vmem:[#allocation2 + $0x50] sm:$0xff]
        %v355 = vld [vmem:[#allocation2 + $0x58] sm:$0xff]
        %v356 = vld [vmem:[#allocation2 + $0x60] sm:$0xff]
        %v357 = vld [vmem:[#allocation2 + $0x68] sm:$0xff]
        %v358 = vld [vmem:[#allocation2 + $0x70] sm:$0xff]
        %v359 = vld [vmem:[#allocation2 + $0x78] sm:$0xff]
        %v360 = vld [vmem:[#allocation2 + $0x80] sm:$0xff]
        %v361 = vld [vmem:[#allocation2 + $0x88] sm:$0xff]
        %v362 = vld [vmem:[#allocation2 + $0x90] sm:$0xff]
        %v363 = vld [vmem:[#allocation2 + $0x98] sm:$0xff]
        %v364 = vld [vmem:[#allocation2 + $0xa0] sm:$0xff]
        %v365 = vld [vmem:[#allocation2 + $0xa8] sm:$0xff]
        %v366 = vld [vmem:[#allocation2 + $0xb0] sm:$0xff]
        %v367 = vld [vmem:[#allocation2 + $0xb8] sm:$0xff]
        %v368 = vld [vmem:[#allocation2 + $0xc0] sm:$0xff]
        %v369 = vld [vmem:[#allocation2 + $0xc8] sm:$0xff]
        %v370 = vld [vmem:[#allocation2 + $0xd0] sm:$0xff]
        %v371 = vld [vmem:[#allocation2 + $0xd8] sm:$0xff]
        %v372 = vld [vmem:[#allocation2 + $0xe0] sm:$0xff]
        %v373 = vld [vmem:[#allocation2 + $0xe8] sm:$0xff]
        %v374 = vld [vmem:[#allocation2 + $0xf0] sm:$0xff]
        %v375 = vld [vmem:[#allocation2 + $0xf8] sm:$0xff]
        %v376 = vld [vmem:[#allocation2 + $0x100] sm:$0xff]
        %v377 = vld [vmem:[#allocation2 + $0x108] sm:$0xff]
        %v378 = vld [vmem:[#allocation2 + $0x110] sm:$0xff]
        %v379 = vld [vmem:[#allocation2 + $0x118] sm:$0xff]
        %v380 = vld [vmem:[#allocation2 + $0x120] sm:$0xff]
        %v381 = vld [vmem:[#allocation2 + $0x128] sm:$0xff]
        %v382 = vld [vmem:[#allocation2 + $0x130] sm:$0xff]
        %v383 = vld [vmem:[#allocation2 + $0x138] sm:$0xff]
        %v384 = vld [vmem:[#allocation2 + $0x140] sm:$0xff]
        %v385 = vld [vmem:[#allocation2 + $0x148] sm:$0xff]
        %v386 = vld [vmem:[#allocation2 + $0x150] sm:$0xff]
        %v387 = vld [vmem:[#allocation2 + $0x158] sm:$0xff]
        %v388 = vld [vmem:[#allocation2 + $0x160] sm:$0xff]
        %v389 = vld [vmem:[#allocation2 + $0x168] sm:$0xff]
        %v390 = vld [vmem:[#allocation2 + $0x170] sm:$0xff]
        %v391 = vld [vmem:[#allocation2 + $0x178] sm:$0xff]
        %v392 = vld [vmem:[#allocation2 + $0x180] sm:$0xff]
        %v393 = vld [vmem:[#allocation2 + $0x188] sm:$0xff]
        %v394 = vld [vmem:[#allocation2 + $0x190] sm:$0xff]
        %v395 = vld [vmem:[#allocation2 + $0x198] sm:$0xff]
        %v396 = vld [vmem:[#allocation2 + $0x1a0] sm:$0xff]
        %v397 = vld [vmem:[#allocation2 + $0x1a8] sm:$0xff]
        %v398 = vld [vmem:[#allocation2 + $0x1b0] sm:$0xff]
        %v399 = vld [vmem:[#allocation2 + $0x1b8] sm:$0xff]
        %v400 = vld [vmem:[#allocation2 + $0x1c0] sm:$0xff]
        %v401 = vld [vmem:[#allocation2 + $0x1c8] sm:$0xff]
        %v402 = vld [vmem:[#allocation2 + $0x1d0] sm:$0xff]
        %v403 = vld [vmem:[#allocation2 + $0x1d8] sm:$0xff]
        %v404 = vld [vmem:[#allocation2 + $0x1e0] sm:$0xff]
        %v405 = vld [vmem:[#allocation2 + $0x1e8] sm:$0xff]
        %v406 = vld [vmem:[#allocation2 + $0x1f0] sm:$0xff]
        %v407 = vld [vmem:[#allocation2 + $0x1f8] sm:$0xff]
        %v408 = vld [vmem:[#allocation2 + $0x200] sm:$0xff]
        %v409 = vld [vmem:[#allocation2 + $0x208] sm:$0xff]
        %v410 = vld [vmem:[#allocation2 + $0x210] sm:$0xff]
        %v411 = vld [vmem:[#allocation2 + $0x218] sm:$0xff]
        %v412 = vld [vmem:[#allocation2 + $0x220] sm:$0xff]
        %v413 = vld [vmem:[#allocation2 + $0x228] sm:$0xff]
        %v414 = vld [vmem:[#allocation2 + $0x230] sm:$0xff]
        %v415 = vld [vmem:[#allocation2 + $0x238] sm:$0xff]
        %v416 = vld [vmem:[%s336] sm:$0xff]
        %v417 = vld [vmem:[%s336 + $0x8] sm:$0xff]
        %v418 = vld [vmem:[%s336 + $0x10] sm:$0xff]
        %v419 = vld [vmem:[#allocation4] sm:$0xff]
        %v420 = vld [vmem:[#allocation4 + $0x8] sm:$0xff]
        %v421 = vld [vmem:[#allocation4 + $0x10] sm:$0xff]
        %v422 = vld [vmem:[#allocation4 + $0x18] sm:$0xff]
        %v423 = vld [vmem:[#allocation4 + $0x20] sm:$0xff]
        %v424 = vld [vmem:[#allocation4 + $0x28] sm:$0xff]
        %v425 = vld [vmem:[#allocation4 + $0x30] sm:$0xff]
        %v426 = vld [vmem:[#allocation4 + $0x38] sm:$0xff]
        %v427 = vld [vmem:[#allocation4 + $0x40] sm:$0xff]
        %v428 = vld [vmem:[#allocation4 + $0x48] sm:$0xff]
        %v429 = vld [vmem:[#allocation4 + $0x50] sm:$0xff]
        %v430 = vld [vmem:[#allocation4 + $0x58] sm:$0xff]
        %v431 = vld [vmem:[#allocation4 + $0x60] sm:$0xff]
        %v432 = vld [vmem:[#allocation4 + $0x68] sm:$0xff]
        %v433 = vld [vmem:[#allocation4 + $0x70] sm:$0xff]
        %v434 = vld [vmem:[#allocation4 + $0x78] sm:$0xff]
        %v435 = vld [vmem:[#allocation4 + $0x80] sm:$0xff]
        %v436 = vld [vmem:[#allocation4 + $0x88] sm:$0xff]
        %v437 = vld [vmem:[#allocation4 + $0x90] sm:$0xff]
        %v438 = vld [vmem:[#allocation4 + $0x98] sm:$0xff]
        %v439 = vld [vmem:[#allocation4 + $0xa0] sm:$0xff]
        %v440 = vld [vmem:[#allocation4 + $0xa8] sm:$0xff]
        %v441 = vld [vmem:[#allocation4 + $0xb0] sm:$0xff]
        %v442 = vld [vmem:[#allocation4 + $0xb8] sm:$0xff]
        %v443 = vld [vmem:[#allocation4 + $0xc0] sm:$0xff]
        %v444 = vld [vmem:[#allocation4 + $0xc8] sm:$0xff]
        %v445 = vld [vmem:[#allocation4 + $0xd0] sm:$0xff]
        %v446 = vld [vmem:[#allocation4 + $0xd8] sm:$0xff]
        %v447 = vld [vmem:[#allocation4 + $0xe0] sm:$0xff]
        %v448 = vld [vmem:[#allocation4 + $0xe8] sm:$0xff]
        %v449 = vld [vmem:[#allocation4 + $0xf0] sm:$0xff]
        %v450 = vld [vmem:[#allocation4 + $0xf8] sm:$0xff]
        %v451 = vld [vmem:[#allocation4 + $0x100] sm:$0xff]
        %v452 = vld [vmem:[#allocation4 + $0x108] sm:$0xff]
        %v453 = vld [vmem:[#allocation4 + $0x110] sm:$0xff]
        %v454 = vld [vmem:[#allocation4 + $0x118] sm:$0xff]
        %v455 = vld [vmem:[#allocation4 + $0x120] sm:$0xff]
        %v456 = vld [vmem:[#allocation4 + $0x128] sm:$0xff]
        %v457 = vld [vmem:[#allocation4 + $0x130] sm:$0xff]
        %v458 = vld [vmem:[#allocation4 + $0x138] sm:$0xff]
        %v459 = vld [vmem:[#allocation4 + $0x140] sm:$0xff]
        %v460 = vld [vmem:[#allocation4 + $0x148] sm:$0xff]
        %v461 = vld [vmem:[#allocation4 + $0x150] sm:$0xff]
        %v462 = vld [vmem:[#allocation4 + $0x158] sm:$0xff]
        %v463 = vld [vmem:[#allocation4 + $0x160] sm:$0xff]
        %v464 = vld [vmem:[#allocation4 + $0x168] sm:$0xff]
        %v465 = vld [vmem:[#allocation4 + $0x170] sm:$0xff]
        %v466 = vld [vmem:[#allocation4 + $0x178] sm:$0xff]
        %v467 = vld [vmem:[#allocation4 + $0x180] sm:$0xff]
        %v468 = vld [vmem:[#allocation4 + $0x188] sm:$0xff]
        %v469 = vld [vmem:[#allocation4 + $0x190] sm:$0xff]
        %v470 = vld [vmem:[#allocation4 + $0x198] sm:$0xff]
        %v471 = vld [vmem:[#allocation4 + $0x1a0] sm:$0xff]
        %v472 = vld [vmem:[#allocation4 + $0x1a8] sm:$0xff]
        %v473 = vld [vmem:[#allocation4 + $0x1b0] sm:$0xff]
        %v474 = vld [vmem:[#allocation4 + $0x1b8] sm:$0xff]
        %v475 = vld [vmem:[#allocation4 + $0x1c0] sm:$0xff]
        %v476 = vld [vmem:[#allocation4 + $0x1c8] sm:$0xff]
        %v477 = vld [vmem:[#allocation4 + $0x1d0] sm:$0xff]
        %v478 = vld [vmem:[#allocation4 + $0x1d8] sm:$0xff]
        %v479 = vld [vmem:[#allocation4 + $0x1e0] sm:$0xff]
        %v480 = vld [vmem:[#allocation4 + $0x1e8] sm:$0xff]
        %v481 = vld [vmem:[#allocation4 + $0x1f0] sm:$0xff]
        %v482 = vld [vmem:[#allocation4 + $0x1f8] sm:$0xff]
        %v483 = vld [vmem:[#allocation4 + $0x200] sm:$0xff]
        %v484 = vld [vmem:[#allocation4 + $0x208] sm:$0xff]
        %v485 = vld [vmem:[#allocation4 + $0x210] sm:$0xff]
        %v486 = vld [vmem:[#allocation4 + $0x218] sm:$0xff]
        %v487 = vld [vmem:[#allocation4 + $0x220] sm:$0xff]
        %v488 = vld [vmem:[#allocation4 + $0x228] sm:$0xff]
        %v489 = vld [vmem:[#allocation4 + $0x230] sm:$0xff]
        %v490 = vld [vmem:[#allocation4 + $0x238] sm:$0xff]
        %vm491 = vcmask 261120
        %v493 = vsel %vm491, %v418, 0
        %495 = vmatprep.subr.mxu0 %v450
        %496 = vmatpush1.msra.mxu0 %v449
        %497 = vmatprep.subr.mxu0 %v448
        %498 = vmatpush1.msra.mxu0 %v447
        %499 = vmatprep.subr.mxu0 %v446
        %500 = vmatpush1.msra.mxu0 %v445
        %501 = vmatprep.subr.mxu0 %v444
        %502 = vmatpush1.msra.mxu0 %v443
        %503 = vmatprep.subr.mxu0 %v442
        %504 = vmatpush1.msra.mxu0 %v441
        %505 = vmatprep.subr.mxu0 %v440
        %506 = vmatpush1.msra.mxu0 %v439
        %507 = vmatprep.subr.mxu0 %v438
        %508 = vmatpush1.msra.mxu0 %v437
        %509 = vmatprep.subr.mxu0 %v436
        %510 = vmatpush1.msra.mxu0 %v435
        %511 = vmatprep.subr.mxu0 %v434
        %512 = vmatpush1.msra.mxu0 %v433
        %513 = vmatprep.subr.mxu0 %v432
        %514 = vmatpush1.msra.mxu0 %v431
        %515 = vmatprep.subr.mxu0 %v430
        %516 = vmatpush1.msra.mxu0 %v429
        %517 = vmatprep.subr.mxu0 %v428
        %518 = vmatpush1.msra.mxu0 %v427
        %519 = vmatprep.subr.mxu0 %v426
        %520 = vmatpush1.msra.mxu0 %v425
        %521 = vmatprep.subr.mxu0 %v424
        %522 = vmatpush1.msra.mxu0 %v423
        %523 = vmatprep.subr.mxu0 %v422
        %524 = vmatpush1.msra.mxu0 %v421
        %525 = vmatprep.subr.mxu0 %v420
        %526 = vmatpush1.msra.mxu0 %v419
        %527 = vmatprep.subr.mxu0 %v482
        %528 = vmatpush2.msra.mxu0 %v481
        %529 = vmatprep.subr.mxu0 %v480
        %530 = vmatpush2.msra.mxu0 %v479
        %531 = vmatprep.subr.mxu0 %v478
        %532 = vmatpush2.msra.mxu0 %v477
        %533 = vmatprep.subr.mxu0 %v476
        %534 = vmatpush2.msra.mxu0 %v475
        %535 = vmatprep.subr.mxu0 %v474
        %536 = vmatpush2.msra.mxu0 %v473
        %537 = vmatprep.subr.mxu0 %v472
        %538 = vmatpush2.msra.mxu0 %v471
        %539 = vmatprep.subr.mxu0 %v470
        %540 = vmatpush2.msra.mxu0 %v469
        %541 = vmatprep.subr.mxu0 %v468
        %542 = vmatpush2.msra.mxu0 %v467
        %543 = vmatprep.subr.mxu0 %v466
        %544 = vmatpush2.msra.mxu0 %v465
        %545 = vmatprep.subr.mxu0 %v464
        %546 = vmatpush2.msra.mxu0 %v463
        %547 = vmatprep.subr.mxu0 %v462
        %548 = vmatpush2.msra.mxu0 %v461
        %549 = vmatprep.subr.mxu0 %v460
        %550 = vmatpush2.msra.mxu0 %v459
        %551 = vmatprep.subr.mxu0 %v458
        %552 = vmatpush2.msra.mxu0 %v457
        %553 = vmatprep.subr.mxu0 %v456
        %554 = vmatpush2.msra.mxu0 %v455
        %555 = vmatprep.subr.mxu0 %v454
        %556 = vmatpush2.msra.mxu0 %v453
        %557 = vmatprep.subr.mxu0 %v452
        %558 = vmatpush2.msra.mxu0 %v451
        %559 = vmatprep.mubr.f32.mxu0 %v417
        %560 = vmatmul.mubr.f32.gmra.mxu0 %v416
        %v561 = vpop.f32.mrf.mxu0
        %v562 = vadd.f32 0.0, %v561
        %v563 = vpop.f32.mrf.mxu0
        %v564 = vadd.f32 0.0, %v563
        %565 = vdwg.mxu0
        %566 = vmatprep.subr.mxu0 0.0
        %567 = vmatpush1.msra.mxu0 0.0
        %568 = vmatprep.subr.mxu0 0.0
        %569 = vmatpush1.msra.mxu0 0.0
        %570 = vmatprep.subr.mxu0 0.0
        %571 = vmatpush1.msra.mxu0 0.0
        %572 = vmatprep.subr.mxu0 0.0
        %573 = vmatpush1.msra.mxu0 0.0
        %574 = vmatprep.subr.mxu0 0.0
        %575 = vmatpush1.msra.mxu0 0.0
        %576 = vmatprep.subr.mxu0 0.0
        %577 = vmatpush1.msra.mxu0 0.0
        %578 = vmatprep.subr.mxu0 0.0
        %579 = vmatpush1.msra.mxu0 0.0
        %580 = vmatprep.subr.mxu0 0.0
        %581 = vmatpush1.msra.mxu0 0.0
        %582 = vmatprep.subr.mxu0 0.0
        %583 = vmatpush1.msra.mxu0 0.0
        %584 = vmatprep.subr.mxu0 0.0
        %585 = vmatpush1.msra.mxu0 0.0
        %586 = vmatprep.subr.mxu0 0.0
        %587 = vmatpush1.msra.mxu0 0.0
        %588 = vmatprep.subr.mxu0 0.0
        %589 = vmatpush1.msra.mxu0 0.0
        %590 = vmatprep.subr.mxu0 %v490
        %591 = vmatpush1.msra.mxu0 %v489
        %592 = vmatprep.subr.mxu0 %v488
        %593 = vmatpush1.msra.mxu0 %v487
        %594 = vmatprep.subr.mxu0 %v486
        %595 = vmatpush1.msra.mxu0 %v485
        %596 = vmatprep.subr.mxu0 %v484
        %597 = vmatpush1.msra.mxu0 %v483
        %598 = vmatprep.subr.mxu0 0.0
        %599 = vmatpush2.msra.mxu0 0.0
        %600 = vmatprep.subr.mxu0 0.0
        %601 = vmatpush2.msra.mxu0 0.0
        %602 = vmatprep.subr.mxu0 0.0
        %603 = vmatpush2.msra.mxu0 0.0
        %604 = vmatprep.subr.mxu0 0.0
        %605 = vmatpush2.msra.mxu0 0.0
        %606 = vmatprep.subr.mxu0 0.0
        %607 = vmatpush2.msra.mxu0 0.0
        %608 = vmatprep.subr.mxu0 0.0
        %609 = vmatpush2.msra.mxu0 0.0
        %610 = vmatprep.subr.mxu0 0.0
        %611 = vmatpush2.msra.mxu0 0.0
        %612 = vmatprep.subr.mxu0 0.0
        %613 = vmatpush2.msra.mxu0 0.0
        %614 = vmatprep.subr.mxu0 0.0
        %615 = vmatpush2.msra.mxu0 0.0
        %616 = vmatprep.subr.mxu0 0.0
        %617 = vmatpush2.msra.mxu0 0.0
        %618 = vmatprep.subr.mxu0 0.0
        %619 = vmatpush2.msra.mxu0 0.0
        %620 = vmatprep.subr.mxu0 0.0
        %621 = vmatpush2.msra.mxu0 0.0
        %622 = vmatprep.subr.mxu0 0.0
        %623 = vmatpush2.msra.mxu0 0.0
        %624 = vmatprep.subr.mxu0 0.0
        %625 = vmatpush2.msra.mxu0 0.0
        %626 = vmatprep.subr.mxu0 0.0
        %627 = vmatpush2.msra.mxu0 0.0
        %628 = vmatprep.subr.mxu0 0.0
        %629 = vmatpush2.msra.mxu0 0.0
        %630 = vmatprep.mubr.f32.mxu0 0.0
        %631 = vmatmul.mubr.f32.gmra.mxu0 %v493
        %v632 = vpop.f32.mrf.mxu0
        %v633 = vadd.f32 %v562, %v632
        %v634 = vpop.f32.mrf.mxu0
        %v635 = vadd.f32 %v564, %v634
        %636 = vdwg.mxu0
        %v638 = vsel %vm491, %v343, 0
        %640 = vmatprep.subr.mxu0 %v375
        %641 = vmatpush1.msra.mxu0 %v374
        %642 = vmatprep.subr.mxu0 %v373
        %643 = vmatpush1.msra.mxu0 %v372
        %644 = vmatprep.subr.mxu0 %v371
        %645 = vmatpush1.msra.mxu0 %v370
        %646 = vmatprep.subr.mxu0 %v369
        %647 = vmatpush1.msra.mxu0 %v368
        %648 = vmatprep.subr.mxu0 %v367
        %649 = vmatpush1.msra.mxu0 %v366
        %650 = vmatprep.subr.mxu0 %v365
        %651 = vmatpush1.msra.mxu0 %v364
        %652 = vmatprep.subr.mxu0 %v363
        %653 = vmatpush1.msra.mxu0 %v362
        %654 = vmatprep.subr.mxu0 %v361
        %655 = vmatpush1.msra.mxu0 %v360
        %656 = vmatprep.subr.mxu0 %v359
        %657 = vmatpush1.msra.mxu0 %v358
        %658 = vmatprep.subr.mxu0 %v357
        %659 = vmatpush1.msra.mxu0 %v356
        %660 = vmatprep.subr.mxu0 %v355
        %661 = vmatpush1.msra.mxu0 %v354
        %662 = vmatprep.subr.mxu0 %v353
        %663 = vmatpush1.msra.mxu0 %v352
        %664 = vmatprep.subr.mxu0 %v351
        %665 = vmatpush1.msra.mxu0 %v350
        %666 = vmatprep.subr.mxu0 %v349
        %667 = vmatpush1.msra.mxu0 %v348
        %668 = vmatprep.subr.mxu0 %v347
        %669 = vmatpush1.msra.mxu0 %v346
        %670 = vmatprep.subr.mxu0 %v345
        %671 = vmatpush1.msra.mxu0 %v344
        %672 = vmatprep.subr.mxu0 %v407
        %673 = vmatpush2.msra.mxu0 %v406
        %674 = vmatprep.subr.mxu0 %v405
        %675 = vmatpush2.msra.mxu0 %v404
        %676 = vmatprep.subr.mxu0 %v403
        %677 = vmatpush2.msra.mxu0 %v402
        %678 = vmatprep.subr.mxu0 %v401
        %679 = vmatpush2.msra.mxu0 %v400
        %680 = vmatprep.subr.mxu0 %v399
        %681 = vmatpush2.msra.mxu0 %v398
        %682 = vmatprep.subr.mxu0 %v397
        %683 = vmatpush2.msra.mxu0 %v396
        %684 = vmatprep.subr.mxu0 %v395
        %685 = vmatpush2.msra.mxu0 %v394
        %686 = vmatprep.subr.mxu0 %v393
        %687 = vmatpush2.msra.mxu0 %v392
        %688 = vmatprep.subr.mxu0 %v391
        %689 = vmatpush2.msra.mxu0 %v390
        %690 = vmatprep.subr.mxu0 %v389
        %691 = vmatpush2.msra.mxu0 %v388
        %692 = vmatprep.subr.mxu0 %v387
        %693 = vmatpush2.msra.mxu0 %v386
        %694 = vmatprep.subr.mxu0 %v385
        %695 = vmatpush2.msra.mxu0 %v384
        %696 = vmatprep.subr.mxu0 %v383
        %697 = vmatpush2.msra.mxu0 %v382
        %698 = vmatprep.subr.mxu0 %v381
        %699 = vmatpush2.msra.mxu0 %v380
        %700 = vmatprep.subr.mxu0 %v379
        %701 = vmatpush2.msra.mxu0 %v378
        %702 = vmatprep.subr.mxu0 %v377
        %703 = vmatpush2.msra.mxu0 %v376
        %704 = vmatprep.mubr.f32.mxu0 %v342
        %705 = vmatmul.mubr.f32.gmra.mxu0 %v341
        %v706 = vpop.f32.mrf.mxu0
        %v707 = vadd.f32 %v633, %v706
        %v708 = vpop.f32.mrf.mxu0
        %v709 = vadd.f32 %v635, %v708
        %710 = vdwg.mxu0
        %711 = vmatprep.subr.mxu0 0.0
        %712 = vmatpush1.msra.mxu0 0.0
        %713 = vmatprep.subr.mxu0 0.0
        %714 = vmatpush1.msra.mxu0 0.0
        %715 = vmatprep.subr.mxu0 0.0
        %716 = vmatpush1.msra.mxu0 0.0
        %717 = vmatprep.subr.mxu0 0.0
        %718 = vmatpush1.msra.mxu0 0.0
        %719 = vmatprep.subr.mxu0 0.0
        %720 = vmatpush1.msra.mxu0 0.0
        %721 = vmatprep.subr.mxu0 0.0
        %722 = vmatpush1.msra.mxu0 0.0
        %723 = vmatprep.subr.mxu0 0.0
        %724 = vmatpush1.msra.mxu0 0.0
        %725 = vmatprep.subr.mxu0 0.0
        %726 = vmatpush1.msra.mxu0 0.0
        %727 = vmatprep.subr.mxu0 0.0
        %728 = vmatpush1.msra.mxu0 0.0
        %729 = vmatprep.subr.mxu0 0.0
        %730 = vmatpush1.msra.mxu0 0.0
        %731 = vmatprep.subr.mxu0 0.0
        %732 = vmatpush1.msra.mxu0 0.0
        %733 = vmatprep.subr.mxu0 0.0
        %734 = vmatpush1.msra.mxu0 0.0
        %735 = vmatprep.subr.mxu0 %v415
        %736 = vmatpush1.msra.mxu0 %v414
        %737 = vmatprep.subr.mxu0 %v413
        %738 = vmatpush1.msra.mxu0 %v412
        %739 = vmatprep.subr.mxu0 %v411
        %740 = vmatpush1.msra.mxu0 %v410
        %741 = vmatprep.subr.mxu0 %v409
        %742 = vmatpush1.msra.mxu0 %v408
        %743 = vmatprep.subr.mxu0 0.0
        %744 = vmatpush2.msra.mxu0 0.0
        %745 = vmatprep.subr.mxu0 0.0
        %746 = vmatpush2.msra.mxu0 0.0
        %747 = vmatprep.subr.mxu0 0.0
        %748 = vmatpush2.msra.mxu0 0.0
        %749 = vmatprep.subr.mxu0 0.0
        %750 = vmatpush2.msra.mxu0 0.0
        %751 = vmatprep.subr.mxu0 0.0
        %752 = vmatpush2.msra.mxu0 0.0
        %753 = vmatprep.subr.mxu0 0.0
        %754 = vmatpush2.msra.mxu0 0.0
        %755 = vmatprep.subr.mxu0 0.0
        %756 = vmatpush2.msra.mxu0 0.0
        %757 = vmatprep.subr.mxu0 0.0
        %758 = vmatpush2.msra.mxu0 0.0
        %759 = vmatprep.subr.mxu0 0.0
        %760 = vmatpush2.msra.mxu0 0.0
        %761 = vmatprep.subr.mxu0 0.0
        %762 = vmatpush2.msra.mxu0 0.0
        %763 = vmatprep.subr.mxu0 0.0
        %764 = vmatpush2.msra.mxu0 0.0
        %765 = vmatprep.subr.mxu0 0.0
        %766 = vmatpush2.msra.mxu0 0.0
        %767 = vmatprep.subr.mxu0 0.0
        %768 = vmatpush2.msra.mxu0 0.0
        %769 = vmatprep.subr.mxu0 0.0
        %770 = vmatpush2.msra.mxu0 0.0
        %771 = vmatprep.subr.mxu0 0.0
        %772 = vmatpush2.msra.mxu0 0.0
        %773 = vmatprep.subr.mxu0 0.0
        %774 = vmatpush2.msra.mxu0 0.0
        %775 = vmatprep.mubr.f32.mxu0 0.0
        %776 = vmatmul.mubr.f32.gmra.mxu0 %v638
        %v777 = vpop.f32.mrf.mxu0
        %v778 = vadd.f32 %v707, %v777
        %v779 = vpop.f32.mrf.mxu0
        %v780 = vadd.f32 %v709, %v779
        %781 = vdwg.mxu0
        %v782 = vld [vmem:[%s4] sm:$0x3]
        %v784 = vlaneseq
        %v785 = vshrl.u32 %v784, 7
        %v786 = vsub.s32 0, %v785
        %v787 = vrot.slane %v782, %v786
        %v788 = vlaneseq
        %v789 = vshrl.u32 %v788, 7
        %v790 = vsub.s32 1, %v789
        %v791 = vrot.slane %v782, %v790
        %v794 = vadd.f32 %v778, %v787
        %v795 = vadd.f32 %v780, %v791
        %v796 = vmax.f32 %v794, 0.0
        %v797 = vmax.f32 %v795, 0.0
        %v798 = vld [vmem:[#allocation6] sm:$0xff]
        %v799 = vld [vmem:[#allocation6 + $0x8] sm:$0xff]
        %v800 = vld [vmem:[#allocation6 + $0x10] sm:$0xff]
        %v801 = vld [vmem:[#allocation6 + $0x18] sm:$0xff]
        %v802 = vld [vmem:[#allocation6 + $0x20] sm:$0xff]
        %v803 = vld [vmem:[#allocation6 + $0x28] sm:$0xff]
        %v804 = vld [vmem:[#allocation6 + $0x30] sm:$0xff]
        %v805 = vld [vmem:[#allocation6 + $0x38] sm:$0xff]
        %v806 = vld [vmem:[#allocation6 + $0x40] sm:$0xff]
        %v807 = vld [vmem:[#allocation6 + $0x48] sm:$0xff]
        %v808 = vld [vmem:[#allocation6 + $0x50] sm:$0xff]
        %v809 = vld [vmem:[#allocation6 + $0x58] sm:$0xff]
        %v810 = vld [vmem:[#allocation6 + $0x60] sm:$0xff]
        %v811 = vld [vmem:[#allocation6 + $0x68] sm:$0xff]
        %v812 = vld [vmem:[#allocation6 + $0x70] sm:$0xff]
        %v813 = vld [vmem:[#allocation6 + $0x78] sm:$0xff]
        %v814 = vld [vmem:[#allocation6 + $0x80] sm:$0xff]
        %v815 = vld [vmem:[#allocation6 + $0x88] sm:$0xff]
        %v816 = vld [vmem:[#allocation6 + $0x90] sm:$0xff]
        %v817 = vld [vmem:[#allocation6 + $0x98] sm:$0xff]
        %v818 = vld [vmem:[#allocation6 + $0xa0] sm:$0xff]
        %v819 = vld [vmem:[#allocation6 + $0xa8] sm:$0xff]
        %v820 = vld [vmem:[#allocation6 + $0xb0] sm:$0xff]
        %v821 = vld [vmem:[#allocation6 + $0xb8] sm:$0xff]
        %v822 = vld [vmem:[#allocation6 + $0xc0] sm:$0xff]
        %v823 = vld [vmem:[#allocation6 + $0xc8] sm:$0xff]
        %v824 = vld [vmem:[#allocation6 + $0xd0] sm:$0xff]
        %v825 = vld [vmem:[#allocation6 + $0xd8] sm:$0xff]
        %v826 = vld [vmem:[#allocation6 + $0xe0] sm:$0xff]
        %v827 = vld [vmem:[#allocation6 + $0xe8] sm:$0xff]
        %v828 = vld [vmem:[#allocation6 + $0xf0] sm:$0xff]
        %v829 = vld [vmem:[#allocation6 + $0xf8] sm:$0xff]
        %v830 = vld [vmem:[%s6] sm:$0x1]
        %v832 = vlaneseq
        %v833 = vshrl.u32 %v832, 7
        %v834 = vsub.s32 0, %v833
        %v835 = vrot.slane %v830, %v834
        %837 = vmatprep.subr.mxu0 0.0
        %838 = vmatpush1.msra.mxu0 %v813
        %839 = vmatprep.subr.mxu0 0.0
        %840 = vmatpush1.msra.mxu0 %v812
        %841 = vmatprep.subr.mxu0 0.0
        %842 = vmatpush1.msra.mxu0 %v811
        %843 = vmatprep.subr.mxu0 0.0
        %844 = vmatpush1.msra.mxu0 %v810
        %845 = vmatprep.subr.mxu0 0.0
        %846 = vmatpush1.msra.mxu0 %v809
        %847 = vmatprep.subr.mxu0 0.0
        %848 = vmatpush1.msra.mxu0 %v808
        %849 = vmatprep.subr.mxu0 0.0
        %850 = vmatpush1.msra.mxu0 %v807
        %851 = vmatprep.subr.mxu0 0.0
        %852 = vmatpush1.msra.mxu0 %v806
        %853 = vmatprep.subr.mxu0 0.0
        %854 = vmatpush1.msra.mxu0 %v805
        %855 = vmatprep.subr.mxu0 0.0
        %856 = vmatpush1.msra.mxu0 %v804
        %857 = vmatprep.subr.mxu0 0.0
        %858 = vmatpush1.msra.mxu0 %v803
        %859 = vmatprep.subr.mxu0 0.0
        %860 = vmatpush1.msra.mxu0 %v802
        %861 = vmatprep.subr.mxu0 0.0
        %862 = vmatpush1.msra.mxu0 %v801
        %863 = vmatprep.subr.mxu0 0.0
        %864 = vmatpush1.msra.mxu0 %v800
        %865 = vmatprep.subr.mxu0 0.0
        %866 = vmatpush1.msra.mxu0 %v799
        %867 = vmatprep.subr.mxu0 0.0
        %868 = vmatpush1.msra.mxu0 %v798
        %869 = vmatprep.subr.mxu0 0.0
        %870 = vmatpush2.msra.mxu0 %v829
        %871 = vmatprep.subr.mxu0 0.0
        %872 = vmatpush2.msra.mxu0 %v828
        %873 = vmatprep.subr.mxu0 0.0
        %874 = vmatpush2.msra.mxu0 %v827
        %875 = vmatprep.subr.mxu0 0.0
        %876 = vmatpush2.msra.mxu0 %v826
        %877 = vmatprep.subr.mxu0 0.0
        %878 = vmatpush2.msra.mxu0 %v825
        %879 = vmatprep.subr.mxu0 0.0
        %880 = vmatpush2.msra.mxu0 %v824
        %881 = vmatprep.subr.mxu0 0.0
        %882 = vmatpush2.msra.mxu0 %v823
        %883 = vmatprep.subr.mxu0 0.0
        %884 = vmatpush2.msra.mxu0 %v822
        %885 = vmatprep.subr.mxu0 0.0
        %886 = vmatpush2.msra.mxu0 %v821
        %887 = vmatprep.subr.mxu0 0.0
        %888 = vmatpush2.msra.mxu0 %v820
        %889 = vmatprep.subr.mxu0 0.0
        %890 = vmatpush2.msra.mxu0 %v819
        %891 = vmatprep.subr.mxu0 0.0
        %892 = vmatpush2.msra.mxu0 %v818
        %893 = vmatprep.subr.mxu0 0.0
        %894 = vmatpush2.msra.mxu0 %v817
        %895 = vmatprep.subr.mxu0 0.0
        %896 = vmatpush2.msra.mxu0 %v816
        %897 = vmatprep.subr.mxu0 0.0
        %898 = vmatpush2.msra.mxu0 %v815
        %899 = vmatprep.subr.mxu0 0.0
        %900 = vmatpush2.msra.mxu0 %v814
        %901 = vmatprep.mubr.f32.mxu0 %v797
        %902 = vmatmul.mubr.f32.gmra.mxu0 %v796
        %v903 = vpop.f32.mrf.mxu0
        %v904 = vadd.f32 %v835, %v903
        %v905 = vpop.f32.mrf.mxu0
        %906 = vdwg.mxu0
        %907 = vst [vmem:[%s340] sm:$0xff] %v904
        %p908 = scmp.lt.s32.totalorder %s20, 1
        %s909 = scalar_select %p908, %s20, 1
        %s910 = smul.addr %s909, 8
        %s911 = scalar_lea.vmem %s7, %s910
        // Predicated region
        $region61: #{inverse_dynamics_forward.1} parent=47 // pred_check
          %p912 = pneg %p195
        $region62: #{inverse_dynamics_forward.1} parent=47 // pred_check_branch
          %914 = sbr.rel (%p912) target = $region64
        $region63: #{inverse_dynamics_forward.1} parent=47 // pred_region
          _
        $region64: #{inverse_dynamics_forward.1} parent=47 // pred_fallthru
          _
      $region48: #{inverse_dynamics_forward.1} parent=5 // pred_fallthru
        _
      %p915 = scmp.le.s32.totalorder 2, %s15
      // Predicated region
      $region65: #{inverse_dynamics_forward.1} parent=5 // pred_check
        %p916 = pneg %p915
      $region66: #{inverse_dynamics_forward.1} parent=5 // pred_check_branch
        %918 = sbr.rel (%p916) target = $region68
      $region67: #{inverse_dynamics_forward.1} parent=5 // pred_region
        %s919 = ssub.s32 %s15, 2
        // Predicated region
        $region69: #{inverse_dynamics_forward.1} parent=67 // pred_check
          %p920 = pneg %p201
        $region70: #{inverse_dynamics_forward.1} parent=67 // pred_check_branch
          %922 = sbr.rel (%p920) target = $region72
        $region71: #{inverse_dynamics_forward.1} parent=67 // pred_region
          %p923 = scmp.lt.s32.totalorder %s21, 1
          %s924 = scalar_select %p923, %s21, 1
          %s925 = smul.addr %s924, 8
          %s926 = scalar_lea.vmem %s7, %s925
        $region72: #{inverse_dynamics_forward.1} parent=67 // pred_fallthru
          _
      $region68: #{inverse_dynamics_forward.1} parent=5 // pred_fallthru
        _
    $region6: #{inverse_dynamics_forward.1} parent=1 // loop_footer
      %s19 = sadd.s32 1, %s15
    $region7: #{inverse_dynamics_forward.1} parent=1 // loop_footer_branch
      %14 = sbr.rel target = $region3
    $region8: #{inverse_dynamics_forward.1} parent=1 // loop_exit
      _
    %927 = vsyncpa [#allocation3], 1
    %s928 = scalar_lea.sflag [#allocation3], 1
    %929 = vsyncpa %s928, 1
    %930 = vsyncpa [#allocation5], 1

</llo_original>
